<compile_context>
chip_gen: v7x
topology: tpu7x:2x2x1
jax: 0.10.0
libtpu: 0.0.40
codegen_flags: <defaults>
</compile_context>

<pallas_src>
from functools import partial

import jax
import jax.numpy as jnp
from jax.experimental import pallas as pl
from jax.experimental.pallas import tpu as pltpu

LANE = 128   # minimum lane-dense feature alignment
SUB = 16     # batch-tile sublane granularity (safe for bf16 and f32 tiles)


def _round_up(n, m):
    return ((n + m - 1) // m) * m


def _tpu_vmem_capacity_bytes():
    """Per-core VMEM capacity; falls back to the smallest (v7x) if unknown."""
    try:
        return int(pltpu.get_tpu_info().vmem_capacity_bytes)
    except Exception:
        return 64 << 20


def _mxu_align():
    """256 on parts with a 256x256 MXU (v6e/v7x), 128 on v5e and older."""
    try:
        kind = jax.devices()[0].device_kind.lower()
    except Exception:
        return 128
    for tag in ("v2", "v3", "v4", "v5"):
        if tag in kind:
            return 128
    return 256


def _pad_dim(d, align):
    p = _round_up(d, LANE)
    if align > LANE and p >= align:
        p = _round_up(p, align)
    return p


def _batch_tiling(B, vmem_cap):
    """Pick (tile_rows, padded_batch)."""
    max_tb = 512 if vmem_cap > (64 << 20) else 256
    if B <= max_tb:
        tb = _round_up(max(B, 1), SUB)
        b_pad = tb
    else:
        tb = max_tb
        b_pad = _round_up(B, tb)
    # v7x (64 MiB/TC, 2 TCs/chip): make sure the "parallel" batch axis has at
    # least 2 steps to shard across the cores.  Negligible cost elsewhere.
    if vmem_cap <= (64 << 20) and b_pad >= 256 and b_pad // tb < 2:
        tb = _round_up((b_pad + 1) // 2, SUB)
        b_pad = 2 * tb
    return tb, b_pad


def decoder_kernel(x_ref, w1_ref, b1_ref, w2_ref, b2_ref, w3_ref, b3_ref, o_ref):
    # layer1: bf16 MXU inputs, f32 accumulation, bias folded into the epilogue.
    h = jnp.dot(x_ref[...], w1_ref[...], preferred_element_type=jnp.float32)
    h = h + b1_ref[...]
    # layer2
    h = jnp.dot(h.astype(jnp.bfloat16), w2_ref[...],
                preferred_element_type=jnp.float32)
    h = h + b2_ref[...]
    # layer3
    h = jnp.dot(h.astype(jnp.bfloat16), w3_ref[...],
                preferred_element_type=jnp.float32)
    h = h + b3_ref[...]
    o_ref[...] = h.astype(o_ref.dtype)


def pad_params(params):
    """Pad + cast parameters ONCE (call at init/load time, not per forward)."""
    w1, b1, w2, b2, w3, b3 = params
    align = _mxu_align()
    d_in, d1 = w1.shape
    d2, d_out = w2.shape[1], w3.shape[1]

    d_in_p = _pad_dim(d_in, align)
    d1_p = _pad_dim(d1, align)
    d2_p = _pad_dim(d2, align)
    do_p = _pad_dim(d_out, align)

    w1p = jnp.zeros((d_in_p, d1_p), jnp.bfloat16).at[:d_in, :d1].set(w1.astype(jnp.bfloat16))
    w2p = jnp.zeros((d1_p, d2_p), jnp.bfloat16).at[:d1, :d2].set(w2.astype(jnp.bfloat16))
    w3p = jnp.zeros((d2_p, do_p), jnp.bfloat16).at[:d2, :d_out].set(w3.astype(jnp.bfloat16))
    b1p = jnp.zeros((1, d1_p), jnp.float32).at[:, :d1].set(b1)
    b2p = jnp.zeros((1, d2_p), jnp.float32).at[:, :d2].set(b2)
    b3p = jnp.zeros((1, do_p), jnp.float32).at[:, :d_out].set(b3)

    padded = (w1p, b1p, w2p, b2p, w3p, b3p)
    dims = (d_in, d_out)
    return padded, dims


@partial(jax.jit, static_argnames=("d_in", "d_out"))
def decoder_forward(x, padded_params, *, d_in, d_out):
    w1p, b1p, w2p, b2p, w3p, b3p = padded_params
    B = x.shape[0]
    d_in_p, d1_p = w1p.shape
    d2_p, do_p = w3p.shape

    vmem_cap = _tpu_vmem_capacity_bytes()
    tb, b_pad = _batch_tiling(B, vmem_cap)
    grid = (b_pad // tb,)

    # Pad + cast the activation tile (zeros are inert: padded weight rows/cols
    # and bias entries are zero, and all three layers are purely affine).
    xp = jnp.zeros((b_pad, d_in_p), jnp.bfloat16).at[:B, :d_in].set(
        x.astype(jnp.bfloat16))

    # VMEM budget: Pallas double-buffers inputs even with constant index_maps,
    # so count weights/biases twice; plus double-buffered x/out tiles and the
    # live f32 intermediates, with margin.
    weight_bytes = 2 * 2 * (w1p.size + w2p.size + w3p.size)       # bf16, x2 buffers
    bias_bytes = 2 * 4 * (b1p.size + b2p.size + b3p.size)         # f32,  x2 buffers
    act_bytes = 2 * tb * d_in_p * 2 + 2 * tb * do_p * 4           # x (bf16) / out (f32)
    interm_bytes = 2 * tb * max(d1_p, d2_p) * 4                   # f32 intermediates
    budget = weight_bytes + bias_bytes + act_bytes + interm_bytes + (8 << 20)

    # Generation-aware clamp: leave headroom below physical VMEM.
    hard_cap = (52 << 20) if vmem_cap <= (64 << 20) else (104 << 20)
    vmem_limit = int(min(max(budget, 32 << 20), hard_cap))

    resident = lambda i: (0, 0)   # weights / biases: same block every grid step

    out_p = pl.pallas_call(
        decoder_kernel,
        out_shape=jax.ShapeDtypeStruct((b_pad, do_p), x.dtype),
        grid=grid,
        in_specs=[
            pl.BlockSpec((tb, d_in_p), lambda i: (i, 0)),   # x: batch-tiled
            pl.BlockSpec((d_in_p, d1_p), resident),
            pl.BlockSpec((1, d1_p), resident),
            pl.BlockSpec((d1_p, d2_p), resident),
            pl.BlockSpec((1, d2_p), resident),
            pl.BlockSpec((d2_p, do_p), resident),
            pl.BlockSpec((1, do_p), resident),
        ],
        out_specs=pl.BlockSpec((tb, do_p), lambda i: (i, 0)),
        compiler_params=pltpu.CompilerParams(
            dimension_semantics=("parallel",),
            vmem_limit_bytes=vmem_limit,
        ),
    )(xp, w1p, b1p, w2p, b2p, w3p, b3p)

    # Strip batch / lane padding.
    return out_p[:B, :d_out]


def init_params(key, d_in, d_hidden1, d_hidden2, d_out):
    ks = jax.random.split(key, 6)

    def lin(kw, kb, fan_in, fan_out):
        # Kaiming-uniform-ish deterministic init (like nn.Linear's default scale).
        bound = 1.0 / jnp.sqrt(fan_in)
        w = jax.random.uniform(kw, (fan_in, fan_out), jnp.float32, -bound, bound)
        b = jax.random.uniform(kb, (1, fan_out), jnp.float32, -bound, bound)
        # Weights stored pre-transposed (x @ W) and in bf16 for the MXU.
        return w.astype(jnp.bfloat16), b

    w1, b1 = lin(ks[0], ks[1], d_in, d_hidden1)
    w2, b2 = lin(ks[2], ks[3], d_hidden1, d_hidden2)
    w3, b3 = lin(ks[4], ks[5], d_hidden2, d_out)
    return (w1, b1, w2, b2, w3, b3)


def reference_forward(x, params):
    # Plain-JAX reference with the same bf16-input / f32-accumulate math.
    w1, b1, w2, b2, w3, b3 = params
    h = jnp.dot(x.astype(jnp.bfloat16), w1, preferred_element_type=jnp.float32) + b1
    h = jnp.dot(h.astype(jnp.bfloat16), w2, preferred_element_type=jnp.float32) + b2
    h = jnp.dot(h.astype(jnp.bfloat16), w3, preferred_element_type=jnp.float32) + b3
    return h


if __name__ == "__main__":
    key = jax.random.PRNGKey(0)
    k_x, k_p = jax.random.split(key)

    batch, d_in, d_h1, d_h2, d_out = 8, 32, 64, 64, 16
    x = jax.random.normal(k_x, (batch, d_in), jnp.float32)
    params = init_params(k_p, d_in, d_h1, d_h2, d_out)

    # One-time parameter padding/casting (hoisted out of the forward path).
    padded_params, (pd_in, pd_out) = pad_params(params)

    out = decoder_forward(x, padded_params, d_in=pd_in, d_out=pd_out)
    out = jax.block_until_ready(out)

    ref = reference_forward(x, params)
    assert out.shape == (batch, d_out), out.shape
    assert jnp.allclose(out, ref, atol=1e-2, rtol=1e-2), float(jnp.abs(out - ref).max())

    print("KERNEL_OK")
</pallas_src>

<mosaic_0001>
module attributes {stable_mosaic.version = 11 : i64} {
  func.func @decoder_kernel(%arg0: i32, %arg1: memref<16x128xbf16, #tpu.memory_space<vmem>>, %arg2: memref<128x128xbf16, #tpu.memory_space<vmem>>, %arg3: memref<1x128xf32, #tpu.memory_space<vmem>>, %arg4: memref<128x128xbf16, #tpu.memory_space<vmem>>, %arg5: memref<1x128xf32, #tpu.memory_space<vmem>>, %arg6: memref<128x128xbf16, #tpu.memory_space<vmem>>, %arg7: memref<1x128xf32, #tpu.memory_space<vmem>>, %arg8: memref<16x128xf32, #tpu.memory_space<vmem>>) attributes {dimension_semantics = [#tpu.dimension_semantics<parallel>], iteration_bounds = array<i64: 1>, scalar_prefetch = 0 : i64, scratch_operands = 0 : i64, tpu.core_type = #tpu.core_type<tc>, window_params = [{transform_indices = @transform_0, window_bounds = array<i64: 16, 128>}, {pipeline_mode = #tpu.pipeline_mode<synchronous>, transform_indices = @transform_1, window_bounds = array<i64: 128, 128>}, {pipeline_mode = #tpu.pipeline_mode<synchronous>, transform_indices = @transform_2, window_bounds = array<i64: 1, 128>}, {pipeline_mode = #tpu.pipeline_mode<synchronous>, transform_indices = @transform_3, window_bounds = array<i64: 128, 128>}, {pipeline_mode = #tpu.pipeline_mode<synchronous>, transform_indices = @transform_4, window_bounds = array<i64: 1, 128>}, {pipeline_mode = #tpu.pipeline_mode<synchronous>, transform_indices = @transform_5, window_bounds = array<i64: 128, 128>}, {pipeline_mode = #tpu.pipeline_mode<synchronous>, transform_indices = @transform_6, window_bounds = array<i64: 1, 128>}, {transform_indices = @transform_7, window_bounds = array<i64: 16, 128>}]} {
    %c0 = arith.constant 0 : index
    %c0_0 = arith.constant 0 : index
    %0 = vector.load %arg1[%c0, %c0_0] : memref<16x128xbf16, #tpu.memory_space<vmem>>, vector<16x128xbf16>
    %c0_1 = arith.constant 0 : index
    %c0_2 = arith.constant 0 : index
    %1 = vector.load %arg2[%c0_1, %c0_2] : memref<128x128xbf16, #tpu.memory_space<vmem>>, vector<128x128xbf16>
    %cst = arith.constant dense<0.000000e+00> : vector<16x128xf32>
    %2 = tpu.matmul %0, %1, %cst {dimension_numbers = #tpu.dot_dimension_numbers<[1], [0], [0], [1], [0, 0, 1, 1], [], []>} : vector<16x128xbf16>, vector<128x128xbf16>, vector<16x128xf32> -> vector<16x128xf32>
    %c0_3 = arith.constant 0 : index
    %c0_4 = arith.constant 0 : index
    %3 = vector.load %arg3[%c0_3, %c0_4] : memref<1x128xf32, #tpu.memory_space<vmem>>, vector<1x128xf32>
    %4 = vector.broadcast %3 : vector<1x128xf32> to vector<16x128xf32>
    %5 = arith.addf %2, %4 : vector<16x128xf32>
    %6 = arith.truncf %5 : vector<16x128xf32> to vector<16x128xbf16>
    %c0_5 = arith.constant 0 : index
    %c0_6 = arith.constant 0 : index
    %7 = vector.load %arg4[%c0_5, %c0_6] : memref<128x128xbf16, #tpu.memory_space<vmem>>, vector<128x128xbf16>
    %cst_7 = arith.constant dense<0.000000e+00> : vector<16x128xf32>
    %8 = tpu.matmul %6, %7, %cst_7 {dimension_numbers = #tpu.dot_dimension_numbers<[1], [0], [0], [1], [0, 0, 1, 1], [], []>} : vector<16x128xbf16>, vector<128x128xbf16>, vector<16x128xf32> -> vector<16x128xf32>
    %c0_8 = arith.constant 0 : index
    %c0_9 = arith.constant 0 : index
    %9 = vector.load %arg5[%c0_8, %c0_9] : memref<1x128xf32, #tpu.memory_space<vmem>>, vector<1x128xf32>
    %10 = vector.broadcast %9 : vector<1x128xf32> to vector<16x128xf32>
    %11 = arith.addf %8, %10 : vector<16x128xf32>
    %12 = arith.truncf %11 : vector<16x128xf32> to vector<16x128xbf16>
    %c0_10 = arith.constant 0 : index
    %c0_11 = arith.constant 0 : index
    %13 = vector.load %arg6[%c0_10, %c0_11] : memref<128x128xbf16, #tpu.memory_space<vmem>>, vector<128x128xbf16>
    %cst_12 = arith.constant dense<0.000000e+00> : vector<16x128xf32>
    %14 = tpu.matmul %12, %13, %cst_12 {dimension_numbers = #tpu.dot_dimension_numbers<[1], [0], [0], [1], [0, 0, 1, 1], [], []>} : vector<16x128xbf16>, vector<128x128xbf16>, vector<16x128xf32> -> vector<16x128xf32>
    %c0_13 = arith.constant 0 : index
    %c0_14 = arith.constant 0 : index
    %15 = vector.load %arg7[%c0_13, %c0_14] : memref<1x128xf32, #tpu.memory_space<vmem>>, vector<1x128xf32>
    %16 = vector.broadcast %15 : vector<1x128xf32> to vector<16x128xf32>
    %17 = arith.addf %14, %16 : vector<16x128xf32>
    %c0_15 = arith.constant 0 : index
    %c0_16 = arith.constant 0 : index
    %18 = vector.load %arg8[%c0_15, %c0_16] : memref<16x128xf32, #tpu.memory_space<vmem>>, vector<16x128xf32>
    tpu.vector_store %arg8[%c0_15, %c0_16], %17 {strides = array<i32>} : memref<16x128xf32, #tpu.memory_space<vmem>>, vector<16x128xf32>,
    return
  }
  func.func @transform_0(%arg0: i32) -> (i32, i32) {
    %c0_i32 = arith.constant 0 : i32
    %c0_i32_0 = arith.constant 0 : i32
    return %arg0, %c0_i32 : i32, i32
  }
  func.func @transform_1(%arg0: i32) -> (i32, i32) {
    %c0_i32 = arith.constant 0 : i32
    %c0_i32_0 = arith.constant 0 : i32
    %c0_i32_1 = arith.constant 0 : i32
    return %c0_i32, %c0_i32_0 : i32, i32
  }
  func.func @transform_2(%arg0: i32) -> (i32, i32) {
    %c0_i32 = arith.constant 0 : i32
    %c0_i32_0 = arith.constant 0 : i32
    %c0_i32_1 = arith.constant 0 : i32
    return %c0_i32, %c0_i32_0 : i32, i32
  }
  func.func @transform_3(%arg0: i32) -> (i32, i32) {
    %c0_i32 = arith.constant 0 : i32
    %c0_i32_0 = arith.constant 0 : i32
    %c0_i32_1 = arith.constant 0 : i32
    return %c0_i32, %c0_i32_0 : i32, i32
  }
  func.func @transform_4(%arg0: i32) -> (i32, i32) {
    %c0_i32 = arith.constant 0 : i32
    %c0_i32_0 = arith.constant 0 : i32
    %c0_i32_1 = arith.constant 0 : i32
    return %c0_i32, %c0_i32_0 : i32, i32
  }
  func.func @transform_5(%arg0: i32) -> (i32, i32) {
    %c0_i32 = arith.constant 0 : i32
    %c0_i32_0 = arith.constant 0 : i32
    %c0_i32_1 = arith.constant 0 : i32
    return %c0_i32, %c0_i32_0 : i32, i32
  }
  func.func @transform_6(%arg0: i32) -> (i32, i32) {
    %c0_i32 = arith.constant 0 : i32
    %c0_i32_0 = arith.constant 0 : i32
    %c0_i32_1 = arith.constant 0 : i32
    return %c0_i32, %c0_i32_0 : i32, i32
  }
  func.func @transform_7(%arg0: i32) -> (i32, i32) {
    %c0_i32 = arith.constant 0 : i32
    %c0_i32_0 = arith.constant 0 : i32
    return %arg0, %c0_i32 : i32, i32
  }
}

</mosaic_0001>

<llo_original>
// kernel: decoder_forward.1
$region0: #{decoder_forward.1}
  #allocation0 [shape = 'u32[]', space=smem, size = 0x4, offset = 0x4, fixed_abs, tag = 'smem constant byte address 0x4 - core index']
  #allocation1 [shape = 'u32[144,128]{1,0:T(1,128)}', space=vmem, size = 0x12000, scoped, tag = 'internal scratch']
  %s0 = inlined_call_operand.vmem [shape: bf16[16,128], index: 0, kind: input, shape index: {}]
  %s1 = inlined_call_operand.hbm [shape: bf16[128,128], index: 1, kind: input, shape index: {}]
  %s2 = inlined_call_operand.vmem [shape: f32[1,128], index: 2, kind: input, shape index: {}]
  %s3 = inlined_call_operand.hbm [shape: bf16[128,128], index: 3, kind: input, shape index: {}]
  %s4 = inlined_call_operand.vmem [shape: f32[1,128], index: 4, kind: input, shape index: {}]
  %s5 = inlined_call_operand.hbm [shape: bf16[128,128], index: 5, kind: input, shape index: {}]
  %s6 = inlined_call_operand.vmem [shape: f32[1,128], index: 6, kind: input, shape index: {}]
  %s7 = inlined_call_operand.vmem [shape: f32[16,128], index: 7, kind: output, shape index: {}]
  %s8 = sld [smem:[#allocation0]]
  $region50: #{decoder_forward.1} parent=0
    _
  %s10 = ssub.s32 1, %s8
  %s11 = scalar_select 0, %s10, %s8
  $region1: #{decoder_forward.1} parent=0
    #allocation2 [shape = 'u8[32768]{0}', space=vmem, size = 0x8000, scoped, tag = 'input window, operand 1, single buffered']
    #allocation3 [shape = 's32[1]{0}', space=sflag, size = 0x4, scoped, tag = 'scoped memory for decoder_forward.1']
    #allocation4 [shape = 'u8[32768]{0}', space=vmem, size = 0x8000, scoped, tag = 'input window, operand 3, single buffered']
    #allocation5 [shape = 's32[1]{0}', space=sflag, size = 0x4, scoped, tag = 'scoped memory for decoder_forward.1']
    #allocation6 [shape = 'u8[32768]{0}', space=vmem, size = 0x8000, scoped, tag = 'input window, operand 5, single buffered']
    %12 = vsyncpa [#allocation3], 0
    %13 = vsyncpa [#allocation5], 0
    // Predicated region
    $region2: #{decoder_forward.1} parent=1 // pred_check
      _
    $region3: #{decoder_forward.1} parent=1 // pred_check_branch
      %15 = sbr.rel (0) target = $region5
    $region4: #{decoder_forward.1} parent=1 // pred_region
      _
    $region5: #{decoder_forward.1} parent=1 // pred_fallthru
      _
    // Predicated region
    $region6: #{decoder_forward.1} parent=1 // pred_check
      _
    $region7: #{decoder_forward.1} parent=1 // pred_check_branch
      %17 = sbr.rel (0) target = $region9
    $region8: #{decoder_forward.1} parent=1 // pred_region
      %s19 = ssub.s32 1024, 1024
      %20 = vsyncadd [#allocation3], %s19
      %s21 = sshll.u32 [#allocation2], 4
      %s22 = int_to_ptr.vmem [resolvable:$true] %s21
      %27 = dma.hbm_to_vmem [thread:$0]  %s1, 1024, %s22, [#allocation3], 64, 64, 4
    $region9: #{decoder_forward.1} parent=1 // pred_fallthru
      _
    // Predicated region
    $region10: #{decoder_forward.1} parent=1 // pred_check
      _
    $region11: #{decoder_forward.1} parent=1 // pred_check_branch
      %29 = sbr.rel (0) target = $region13
    $region12: #{decoder_forward.1} parent=1 // pred_region
      _
    $region13: #{decoder_forward.1} parent=1 // pred_fallthru
      _
    // Predicated region
    $region14: #{decoder_forward.1} parent=1 // pred_check
      _
    $region15: #{decoder_forward.1} parent=1 // pred_check_branch
      %31 = sbr.rel (0) target = $region17
    $region16: #{decoder_forward.1} parent=1 // pred_region
      %s33 = ssub.s32 1024, 1024
      %34 = vsyncadd [#allocation5], %s33
      %s35 = sshll.u32 [#allocation4], 4
      %s36 = int_to_ptr.vmem [resolvable:$true] %s35
      %41 = dma.hbm_to_vmem [thread:$0]  %s3, 1024, %s36, [#allocation5], 64, 64, 4
    $region17: #{decoder_forward.1} parent=1 // pred_fallthru
      _
    // Predicated region
    $region18: #{decoder_forward.1} parent=1 // pred_check
      _
    $region19: #{decoder_forward.1} parent=1 // pred_check_branch
      %43 = sbr.rel (0) target = $region21
    $region20: #{decoder_forward.1} parent=1 // pred_region
      _
    $region21: #{decoder_forward.1} parent=1 // pred_fallthru
      _
    // Predicated region
    $region22: #{decoder_forward.1} parent=1 // pred_check
      _
    $region23: #{decoder_forward.1} parent=1 // pred_check_branch
      %45 = sbr.rel (0) target = $region25
    $region24: #{decoder_forward.1} parent=1 // pred_region
      %s47 = ssub.s32 1024, 1024
      %48 = vsyncadd [#allocation5], %s47
      %s49 = sshll.u32 [#allocation6], 4
      %s50 = int_to_ptr.vmem [resolvable:$true] %s49
      %55 = dma.hbm_to_vmem [thread:$0]  %s5, 1024, %s50, [#allocation5], 64, 64, 4
    $region25: #{decoder_forward.1} parent=1 // pred_fallthru
      _
    // Predicated region
    $region26: #{decoder_forward.1} parent=1 // pred_check
      _
    $region27: #{decoder_forward.1} parent=1 // pred_check_branch
      %57 = sbr.rel (0) target = $region29
    $region28: #{decoder_forward.1} parent=1 // pred_region
      _
    $region29: #{decoder_forward.1} parent=1 // pred_fallthru
      _
    // Predicated region
    $region30: #{decoder_forward.1} parent=1 // pred_check
      _
    $region31: #{decoder_forward.1} parent=1 // pred_check_branch
      %59 = sbr.rel (0) target = $region33
    $region32: #{decoder_forward.1} parent=1 // pred_region
      %60 = dma.done [#allocation3], 1024
    $region33: #{decoder_forward.1} parent=1 // pred_fallthru
      _
    // Predicated region
    $region34: #{decoder_forward.1} parent=1 // pred_check
      _
    $region35: #{decoder_forward.1} parent=1 // pred_check_branch
      %62 = sbr.rel (0) target = $region37
    $region36: #{decoder_forward.1} parent=1 // pred_region
      %63 = dma.done [#allocation5], 1024
    $region37: #{decoder_forward.1} parent=1 // pred_fallthru
      _
    // Predicated region
    $region38: #{decoder_forward.1} parent=1 // pred_check
      _
    $region39: #{decoder_forward.1} parent=1 // pred_check_branch
      %65 = sbr.rel (0) target = $region41
    $region40: #{decoder_forward.1} parent=1 // pred_region
      %66 = dma.done [#allocation5], 1024
    $region41: #{decoder_forward.1} parent=1 // pred_fallthru
      _
    %v68 = vld [vmem:[%s0] sm:$0xf]
    %v69 = vld [vmem:[%s0 + $0x4] sm:$0xf]
    %v70 = vld [vmem:[#allocation2] sm:$0xf]
    %v71 = vld [vmem:[#allocation2 + $0x4] sm:$0xf]
    %v72 = vld [vmem:[#allocation2 + $0x8] sm:$0xf]
    %v73 = vld [vmem:[#allocation2 + $0xc] sm:$0xf]
    %v74 = vld [vmem:[#allocation2 + $0x10] sm:$0xf]
    %v75 = vld [vmem:[#allocation2 + $0x14] sm:$0xf]
    %v76 = vld [vmem:[#allocation2 + $0x18] sm:$0xf]
    %v77 = vld [vmem:[#allocation2 + $0x1c] sm:$0xf]
    %v78 = vld [vmem:[#allocation2 + $0x20] sm:$0xf]
    %v79 = vld [vmem:[#allocation2 + $0x24] sm:$0xf]
    %v80 = vld [vmem:[#allocation2 + $0x28] sm:$0xf]
    %v81 = vld [vmem:[#allocation2 + $0x2c] sm:$0xf]
    %v82 = vld [vmem:[#allocation2 + $0x30] sm:$0xf]
    %v83 = vld [vmem:[#allocation2 + $0x34] sm:$0xf]
    %v84 = vld [vmem:[#allocation2 + $0x38] sm:$0xf]
    %v85 = vld [vmem:[#allocation2 + $0x3c] sm:$0xf]
    %v86 = vld [vmem:[%s2] sm:$0x1]
    %v88 = vlaneseq
    %v89 = vshrl.u32 %v88, 7
    %v90 = vsub.s32 0, %v89
    %v91 = vrot.slane %v86, %v90
    %v95 = vunpack.c.l.b16 %v68
    %v96 = vunpack.c.l.b16 %v69
    %v97 = vpack.c.b16 %v96, %v95
    %v115 = vunpack.c.l.b16 %v70
    %v116 = vunpack.c.l.b16 %v71
    %v117 = vunpack.c.l.b16 %v72
    %v118 = vunpack.c.l.b16 %v73
    %v119 = vunpack.c.l.b16 %v74
    %v120 = vunpack.c.l.b16 %v75
    %v121 = vunpack.c.l.b16 %v76
    %v122 = vunpack.c.l.b16 %v77
    %v123 = vunpack.c.l.b16 %v78
    %v124 = vunpack.c.l.b16 %v79
    %v125 = vunpack.c.l.b16 %v80
    %v126 = vunpack.c.l.b16 %v81
    %v127 = vunpack.c.l.b16 %v82
    %v128 = vunpack.c.l.b16 %v83
    %v129 = vunpack.c.l.b16 %v84
    %v130 = vunpack.c.l.b16 %v85
    %v131 = vpack.c.b16 %v116, %v115
    %v132 = vpack.c.b16 %v118, %v117
    %v133 = vpack.c.b16 %v120, %v119
    %v134 = vpack.c.b16 %v122, %v121
    %v135 = vpack.c.b16 %v124, %v123
    %v136 = vpack.c.b16 %v126, %v125
    %v137 = vpack.c.b16 %v128, %v127
    %v138 = vpack.c.b16 %v130, %v129
    %147 = vmatprep.subr.bf16.mxu0 0
    %148 = vmatpush1.bf16.msra.mxu0 %v131
    %149 = vmatprep.subr.bf16.mxu0 0
    %150 = vmatpush1.bf16.msra.mxu0 %v132
    %151 = vmatprep.subr.bf16.mxu0 0
    %152 = vmatpush1.bf16.msra.mxu0 %v133
    %153 = vmatprep.subr.bf16.mxu0 0
    %154 = vmatpush1.bf16.msra.mxu0 %v134
    %155 = vmatprep.subr.bf16.mxu0 0
    %156 = vmatpush1.bf16.msra.mxu0 %v135
    %157 = vmatprep.subr.bf16.mxu0 0
    %158 = vmatpush1.bf16.msra.mxu0 %v136
    %159 = vmatprep.subr.bf16.mxu0 0
    %160 = vmatpush1.bf16.msra.mxu0 %v137
    %161 = vmatprep.subr.bf16.mxu0 0
    %162 = vmatpush1.bf16.msra.mxu0 %v138
    %163 = vmatprep.subr.bf16.mxu0 0
    %164 = vmatpush1.bf16.msra.mxu0 0
    %165 = vmatprep.subr.bf16.mxu0 0
    %166 = vmatpush1.bf16.msra.mxu0 0
    %167 = vmatprep.subr.bf16.mxu0 0
    %168 = vmatpush1.bf16.msra.mxu0 0
    %169 = vmatprep.subr.bf16.mxu0 0
    %170 = vmatpush1.bf16.msra.mxu0 0
    %171 = vmatprep.subr.bf16.mxu0 0
    %172 = vmatpush1.bf16.msra.mxu0 0
    %173 = vmatprep.subr.bf16.mxu0 0
    %174 = vmatpush1.bf16.msra.mxu0 0
    %175 = vmatprep.subr.bf16.mxu0 0
    %176 = vmatpush1.bf16.msra.mxu0 0
    %177 = vmatprep.subr.bf16.mxu0 0
    %178 = vmatpush1.bf16.msra.mxu0 0
    %179 = vmatprep.mubr.bf16.mxu0 0
    %180 = vmatmul.mubr.bf16.gmra.mrb[0].mxu0 %v97
    %v181 = vpop.f32.mrb[0].mxu0
    %v182 = vadd.f32 %v91, %v181
    %v183 = vpop.f32.mrb[0].mxu0
    %v184 = vpop.f32.mrb[0].mxu0
    %v185 = vadd.f32 %v91, %v184
    %v186 = vpop.f32.mrb[0].mxu0
    %187 = vdwg.mxu0
    %v188 = vpack.c.bf16 %v185, %v182
    %v189 = vld [vmem:[#allocation4] sm:$0xf]
    %v190 = vld [vmem:[#allocation4 + $0x4] sm:$0xf]
    %v191 = vld [vmem:[#allocation4 + $0x8] sm:$0xf]
    %v192 = vld [vmem:[#allocation4 + $0xc] sm:$0xf]
    %v193 = vld [vmem:[#allocation4 + $0x10] sm:$0xf]
    %v194 = vld [vmem:[#allocation4 + $0x14] sm:$0xf]
    %v195 = vld [vmem:[#allocation4 + $0x18] sm:$0xf]
    %v196 = vld [vmem:[#allocation4 + $0x1c] sm:$0xf]
    %v197 = vld [vmem:[#allocation4 + $0x20] sm:$0xf]
    %v198 = vld [vmem:[#allocation4 + $0x24] sm:$0xf]
    %v199 = vld [vmem:[#allocation4 + $0x28] sm:$0xf]
    %v200 = vld [vmem:[#allocation4 + $0x2c] sm:$0xf]
    %v201 = vld [vmem:[#allocation4 + $0x30] sm:$0xf]
    %v202 = vld [vmem:[#allocation4 + $0x34] sm:$0xf]
    %v203 = vld [vmem:[#allocation4 + $0x38] sm:$0xf]
    %v204 = vld [vmem:[#allocation4 + $0x3c] sm:$0xf]
    %v205 = vld [vmem:[%s4] sm:$0x1]
    %v207 = vlaneseq
    %v208 = vshrl.u32 %v207, 7
    %v209 = vsub.s32 0, %v208
    %v210 = vrot.slane %v205, %v209
    %v228 = vunpack.c.l.b16 %v189
    %v229 = vunpack.c.l.b16 %v190
    %v230 = vunpack.c.l.b16 %v191
    %v231 = vunpack.c.l.b16 %v192
    %v232 = vunpack.c.l.b16 %v193
    %v233 = vunpack.c.l.b16 %v194
    %v234 = vunpack.c.l.b16 %v195
    %v235 = vunpack.c.l.b16 %v196
    %v236 = vunpack.c.l.b16 %v197
    %v237 = vunpack.c.l.b16 %v198
    %v238 = vunpack.c.l.b16 %v199
    %v239 = vunpack.c.l.b16 %v200
    %v240 = vunpack.c.l.b16 %v201
    %v241 = vunpack.c.l.b16 %v202
    %v242 = vunpack.c.l.b16 %v203
    %v243 = vunpack.c.l.b16 %v204
    %v244 = vpack.c.b16 %v229, %v228
    %v245 = vpack.c.b16 %v231, %v230
    %v246 = vpack.c.b16 %v233, %v232
    %v247 = vpack.c.b16 %v235, %v234
    %v248 = vpack.c.b16 %v237, %v236
    %v249 = vpack.c.b16 %v239, %v238
    %v250 = vpack.c.b16 %v241, %v240
    %v251 = vpack.c.b16 %v243, %v242
    %260 = vmatprep.subr.bf16.mxu0 0
    %261 = vmatpush1.bf16.msra.mxu0 %v244
    %262 = vmatprep.subr.bf16.mxu0 0
    %263 = vmatpush1.bf16.msra.mxu0 %v245
    %264 = vmatprep.subr.bf16.mxu0 0
    %265 = vmatpush1.bf16.msra.mxu0 %v246
    %266 = vmatprep.subr.bf16.mxu0 0
    %267 = vmatpush1.bf16.msra.mxu0 %v247
    %268 = vmatprep.subr.bf16.mxu0 0
    %269 = vmatpush1.bf16.msra.mxu0 %v248
    %270 = vmatprep.subr.bf16.mxu0 0
    %271 = vmatpush1.bf16.msra.mxu0 %v249
    %272 = vmatprep.subr.bf16.mxu0 0
    %273 = vmatpush1.bf16.msra.mxu0 %v250
    %274 = vmatprep.subr.bf16.mxu0 0
    %275 = vmatpush1.bf16.msra.mxu0 %v251
    %276 = vmatprep.subr.bf16.mxu0 0
    %277 = vmatpush1.bf16.msra.mxu0 0
    %278 = vmatprep.subr.bf16.mxu0 0
    %279 = vmatpush1.bf16.msra.mxu0 0
    %280 = vmatprep.subr.bf16.mxu0 0
    %281 = vmatpush1.bf16.msra.mxu0 0
    %282 = vmatprep.subr.bf16.mxu0 0
    %283 = vmatpush1.bf16.msra.mxu0 0
    %284 = vmatprep.subr.bf16.mxu0 0
    %285 = vmatpush1.bf16.msra.mxu0 0
    %286 = vmatprep.subr.bf16.mxu0 0
    %287 = vmatpush1.bf16.msra.mxu0 0
    %288 = vmatprep.subr.bf16.mxu0 0
    %289 = vmatpush1.bf16.msra.mxu0 0
    %290 = vmatprep.subr.bf16.mxu0 0
    %291 = vmatpush1.bf16.msra.mxu0 0
    %292 = vmatprep.mubr.bf16.mxu0 0
    %293 = vmatmul.mubr.bf16.gmra.mrb[0].mxu0 %v188
    %v294 = vpop.f32.mrb[0].mxu0
    %v295 = vadd.f32 %v210, %v294
    %v296 = vpop.f32.mrb[0].mxu0
    %v297 = vpop.f32.mrb[0].mxu0
    %v298 = vadd.f32 %v210, %v297
    %v299 = vpop.f32.mrb[0].mxu0
    %300 = vdwg.mxu0
    %v301 = vpack.c.bf16 %v298, %v295
    %v302 = vld [vmem:[#allocation6] sm:$0xf]
    %v303 = vld [vmem:[#allocation6 + $0x4] sm:$0xf]
    %v304 = vld [vmem:[#allocation6 + $0x8] sm:$0xf]
    %v305 = vld [vmem:[#allocation6 + $0xc] sm:$0xf]
    %v306 = vld [vmem:[#allocation6 + $0x10] sm:$0xf]
    %v307 = vld [vmem:[#allocation6 + $0x14] sm:$0xf]
    %v308 = vld [vmem:[#allocation6 + $0x18] sm:$0xf]
    %v309 = vld [vmem:[#allocation6 + $0x1c] sm:$0xf]
    %v310 = vld [vmem:[#allocation6 + $0x20] sm:$0xf]
    %v311 = vld [vmem:[#allocation6 + $0x24] sm:$0xf]
    %v312 = vld [vmem:[#allocation6 + $0x28] sm:$0xf]
    %v313 = vld [vmem:[#allocation6 + $0x2c] sm:$0xf]
    %v314 = vld [vmem:[#allocation6 + $0x30] sm:$0xf]
    %v315 = vld [vmem:[#allocation6 + $0x34] sm:$0xf]
    %v316 = vld [vmem:[#allocation6 + $0x38] sm:$0xf]
    %v317 = vld [vmem:[#allocation6 + $0x3c] sm:$0xf]
    %v318 = vld [vmem:[%s6] sm:$0x1]
    %v320 = vlaneseq
    %v321 = vshrl.u32 %v320, 7
    %v322 = vsub.s32 0, %v321
    %v323 = vrot.slane %v318, %v322
    %v341 = vunpack.c.l.b16 %v302
    %v342 = vunpack.c.l.b16 %v303
    %v343 = vunpack.c.l.b16 %v304
    %v344 = vunpack.c.l.b16 %v305
    %v345 = vunpack.c.l.b16 %v306
    %v346 = vunpack.c.l.b16 %v307
    %v347 = vunpack.c.l.b16 %v308
    %v348 = vunpack.c.l.b16 %v309
    %v349 = vunpack.c.l.b16 %v310
    %v350 = vunpack.c.l.b16 %v311
    %v351 = vunpack.c.l.b16 %v312
    %v352 = vunpack.c.l.b16 %v313
    %v353 = vunpack.c.l.b16 %v314
    %v354 = vunpack.c.l.b16 %v315
    %v355 = vunpack.c.l.b16 %v316
    %v356 = vunpack.c.l.b16 %v317
    %v357 = vpack.c.b16 %v342, %v341
    %v358 = vpack.c.b16 %v344, %v343
    %v359 = vpack.c.b16 %v346, %v345
    %v360 = vpack.c.b16 %v348, %v347
    %v361 = vpack.c.b16 %v350, %v349
    %v362 = vpack.c.b16 %v352, %v351
    %v363 = vpack.c.b16 %v354, %v353
    %v364 = vpack.c.b16 %v356, %v355
    %373 = vmatprep.subr.bf16.mxu0 0
    %374 = vmatpush1.bf16.msra.mxu0 %v357
    %375 = vmatprep.subr.bf16.mxu0 0
    %376 = vmatpush1.bf16.msra.mxu0 %v358
    %377 = vmatprep.subr.bf16.mxu0 0
    %378 = vmatpush1.bf16.msra.mxu0 %v359
    %379 = vmatprep.subr.bf16.mxu0 0
    %380 = vmatpush1.bf16.msra.mxu0 %v360
    %381 = vmatprep.subr.bf16.mxu0 0
    %382 = vmatpush1.bf16.msra.mxu0 %v361
    %383 = vmatprep.subr.bf16.mxu0 0
    %384 = vmatpush1.bf16.msra.mxu0 %v362
    %385 = vmatprep.subr.bf16.mxu0 0
    %386 = vmatpush1.bf16.msra.mxu0 %v363
    %387 = vmatprep.subr.bf16.mxu0 0
    %388 = vmatpush1.bf16.msra.mxu0 %v364
    %389 = vmatprep.subr.bf16.mxu0 0
    %390 = vmatpush1.bf16.msra.mxu0 0
    %391 = vmatprep.subr.bf16.mxu0 0
    %392 = vmatpush1.bf16.msra.mxu0 0
    %393 = vmatprep.subr.bf16.mxu0 0
    %394 = vmatpush1.bf16.msra.mxu0 0
    %395 = vmatprep.subr.bf16.mxu0 0
    %396 = vmatpush1.bf16.msra.mxu0 0
    %397 = vmatprep.subr.bf16.mxu0 0
    %398 = vmatpush1.bf16.msra.mxu0 0
    %399 = vmatprep.subr.bf16.mxu0 0
    %400 = vmatpush1.bf16.msra.mxu0 0
    %401 = vmatprep.subr.bf16.mxu0 0
    %402 = vmatpush1.bf16.msra.mxu0 0
    %403 = vmatprep.subr.bf16.mxu0 0
    %404 = vmatpush1.bf16.msra.mxu0 0
    %405 = vmatprep.mubr.bf16.mxu0 0
    %406 = vmatmul.mubr.bf16.gmra.mrb[0].mxu0 %v301
    %v407 = vpop.f32.mrb[0].mxu0
    %v408 = vadd.f32 %v323, %v407
    %v409 = vpop.f32.mrb[0].mxu0
    %v410 = vpop.f32.mrb[0].mxu0
    %v411 = vadd.f32 %v323, %v410
    %v412 = vpop.f32.mrb[0].mxu0
    %413 = vdwg.mxu0
    %414 = vst [vmem:[%s7] sm:$0xff] %v408
    %415 = vst [vmem:[%s7 + $0x8] sm:$0xff] %v411
    // Predicated region
    $region42: #{decoder_forward.1} parent=1 // pred_check
      _
    $region43: #{decoder_forward.1} parent=1 // pred_check_branch
      %417 = sbr.rel (0) target = $region45
    $region44: #{decoder_forward.1} parent=1 // pred_region
      _
    $region45: #{decoder_forward.1} parent=1 // pred_fallthru
      _
    // Predicated region
    $region46: #{decoder_forward.1} parent=1 // pred_check
      _
    $region47: #{decoder_forward.1} parent=1 // pred_check_branch
      %419 = sbr.rel (0) target = $region49
    $region48: #{decoder_forward.1} parent=1 // pred_region
      _
    $region49: #{decoder_forward.1} parent=1 // pred_fallthru
      _
    %420 = vsyncpa [#allocation3], 1
    %421 = vsyncpa [#allocation5], 1

</llo_original>
